<compile_context>
chip_gen: v7x
topology: tpu7x:2x2x1
jax: 0.10.0
libtpu: 0.0.40
codegen_flags: <defaults>
</compile_context>

<pallas_src>
import jax
import jax.numpy as jnp
from jax.experimental import pallas as pl
from jax.experimental.pallas import tpu as pltpu

_EPS = 1e-12            # F.normalize default eps (clamp applied to the norm)
_EPS_SQ = _EPS * _EPS   # equivalent clamp on the sum of squares

_TM_TARGET = 256        # batch-tile target
_TN_TARGET = 512        # class-tile target (large multiple of 128 -> lane-dense stores)


def _normalized_classifier_kernel(x_ref, wt_ref, inv_w_ref, o_ref):
    """Compute one (tm, tn) tile of cosine-similarity logits.

    x_ref:     (tm, D)  native dtype
    wt_ref:    (D, tn)  native dtype (pre-transposed weight slab)
    inv_w_ref: (1, tn)  f32 per-class inverse L2 norm (hoisted to wrapper)
    o_ref:     (tm, tn)
    """
    x = x_ref[...]

    # Row sum-of-squares in f32 (v5e has no bf16 VPU); rsqrt goes to the EUP.
    xf = x.astype(jnp.float32)
    ss = jnp.sum(xf * xf, axis=-1, keepdims=True)                  # (tm, 1)
    inv_x = jax.lax.rsqrt(jnp.maximum(ss, jnp.float32(_EPS_SQ)))   # (tm, 1)

    # Raw matmul in the input dtype with f32 accumulation on the MXU.
    acc = jnp.dot(x, wt_ref[...], preferred_element_type=jnp.float32)

    # Apply both normalizations as an output scale (no per-element divides).
    o_ref[...] = (acc * inv_x * inv_w_ref[...]).astype(o_ref.dtype)


def _pick_tile(n, target, align):
    """Largest tile <= target that is either the full extent or a multiple of
    `align` (preferring exact divisors of n to avoid ragged edges)."""
    if n <= target:
        return n
    best = (target // align) * align
    t = best
    while t >= align:
        if n % t == 0:
            return t
        t -= align
    return best  # non-dividing tile; Pallas masks the ragged edge


def normalized_classifier(x, weight):
    """x: (B, D); weight: (C, D). Returns (B, C) cosine-similarity logits."""
    B, D = x.shape
    C, Dw = weight.shape
    assert D == Dw

    tm = _pick_tile(B, _TM_TARGET, 8)
    tn = _pick_tile(C, _TN_TARGET, 128)

    # Hoist the (parameter) weight normalization out of the per-tile path and
    # present a lane-dense (D, C) operand so the kernel needs no transpose.
    w32 = weight.astype(jnp.float32)
    inv_w = jax.lax.rsqrt(
        jnp.maximum(jnp.sum(w32 * w32, axis=1, keepdims=True).T, _EPS_SQ)
    )                      # (1, C) f32
    wt = weight.T          # (D, C), native dtype for the MXU

    grid = (pl.cdiv(B, tm), pl.cdiv(C, tn))

    return pl.pallas_call(
        _normalized_classifier_kernel,
        out_shape=jax.ShapeDtypeStruct((B, C), x.dtype),
        grid_spec=pltpu.PrefetchScalarGridSpec(
            num_scalar_prefetch=0,
            grid=grid,
            in_specs=[
                pl.BlockSpec((tm, D), lambda i, j: (i, 0)),   # x batch tile
                pl.BlockSpec((D, tn), lambda i, j: (0, j)),   # weight class slab
                pl.BlockSpec((1, tn), lambda i, j: (0, j)),   # per-class inv norm
            ],
            out_specs=pl.BlockSpec((tm, tn), lambda i, j: (i, j)),
        ),
        compiler_params=pltpu.CompilerParams(
            dimension_semantics=("parallel", "parallel"),
            vmem_limit_bytes=48 * 1024 * 1024,   # headroom, still < v7x 64 MiB
        ),
    )(x, wt, inv_w)


def init_weight(key, num_classes, feature_dim):
    """Deterministic replica of:
       torch.Tensor(C, D).uniform_(-1, 1).renorm_(2, 0, 1e-05).mul_(100000.0)"""
    w = jax.random.uniform(
        key, (num_classes, feature_dim), dtype=jnp.float32, minval=-1.0, maxval=1.0
    )
    maxnorm = 1e-5
    row_norm = jnp.linalg.norm(w, axis=1, keepdims=True)
    scale = jnp.where(row_norm > maxnorm, maxnorm / (row_norm + 1e-7), 1.0)
    return w * scale * 100000.0


def reference(x, weight):
    eps = 1e-12
    x_n = x / jnp.maximum(jnp.linalg.norm(x, axis=1, keepdims=True), eps)
    w_n = weight / jnp.maximum(jnp.linalg.norm(weight, axis=1, keepdims=True), eps)
    return x_n @ w_n.T


if __name__ == "__main__":
    key = jax.random.PRNGKey(0)
    k_w, k_x = jax.random.split(key)

    batch, feature_dim, num_classes = 16, 64, 1024   # gives a (1, 2) tile grid
    weight = init_weight(k_w, num_classes, feature_dim)
    x = jax.random.normal(k_x, (batch, feature_dim), dtype=jnp.float32)

    out = jax.block_until_ready(normalized_classifier(x, weight))

    ref = reference(x, weight)
    assert out.shape == (batch, num_classes)
    # f32 path; with bf16 inputs loosen to ~1e-2 rel (bf16 MXU operands).
    assert jnp.allclose(out, ref, atol=1e-4, rtol=1e-4), "mismatch vs reference"

    print("KERNEL_OK")
</pallas_src>

<mosaic_0001>
module attributes {stable_mosaic.version = 11 : i64} {
  func.func @_normalized_classifier_kernel(%arg0: i32, %arg1: i32, %arg2: memref<16x64xf32, #tpu.memory_space<vmem>>, %arg3: memref<64x512xf32, #tpu.memory_space<vmem>>, %arg4: memref<1x512xf32, #tpu.memory_space<vmem>>, %arg5: memref<16x512xf32, #tpu.memory_space<vmem>>) attributes {dimension_semantics = [#tpu.dimension_semantics<parallel>, #tpu.dimension_semantics<parallel>], iteration_bounds = array<i64: 1, 2>, scalar_prefetch = 0 : i64, scratch_operands = 0 : i64, tpu.core_type = #tpu.core_type<tc>, window_params = [{transform_indices = @transform_0, window_bounds = array<i64: 16, 64>}, {transform_indices = @transform_1, window_bounds = array<i64: 64, 512>}, {transform_indices = @transform_2, window_bounds = array<i64: 1, 512>}, {transform_indices = @transform_3, window_bounds = array<i64: 16, 512>}]} {
    %c0 = arith.constant 0 : index
    %c0_0 = arith.constant 0 : index
    %0 = vector.load %arg2[%c0, %c0_0] : memref<16x64xf32, #tpu.memory_space<vmem>>, vector<16x64xf32>
    %1 = arith.mulf %0, %0 : vector<16x64xf32>
    %cst = arith.constant dense<0.000000e+00> : vector<16xf32>
    %2 = vector.multi_reduction <add>, %1, %cst [1] : vector<16x64xf32> to vector<16xf32>
    %3 = vector.shape_cast %2 : vector<16xf32> to vector<16x1xf32>
    %cst_1 = arith.constant 1.000000e-24 : f32
    %4 = vector.broadcast %cst_1 : f32 to vector<16x1xf32>
    %5 = arith.maximumf %3, %4 : vector<16x1xf32>
    %6 = math.rsqrt %5 : vector<16x1xf32>
    %c0_2 = arith.constant 0 : index
    %c0_3 = arith.constant 0 : index
    %7 = vector.load %arg3[%c0_2, %c0_3] : memref<64x512xf32, #tpu.memory_space<vmem>>, vector<64x512xf32>
    %cst_4 = arith.constant dense<0.000000e+00> : vector<16x512xf32>
    %8 = tpu.matmul %0, %7, %cst_4 {dimension_numbers = #tpu.dot_dimension_numbers<[1], [0], [0], [1], [0, 0, 1, 1], [], []>} : vector<16x64xf32>, vector<64x512xf32>, vector<16x512xf32> -> vector<16x512xf32>
    %9 = vector.broadcast %6 : vector<16x1xf32> to vector<16x512xf32>
    %10 = arith.mulf %8, %9 : vector<16x512xf32>
    %c0_5 = arith.constant 0 : index
    %c0_6 = arith.constant 0 : index
    %11 = vector.load %arg4[%c0_5, %c0_6] : memref<1x512xf32, #tpu.memory_space<vmem>>, vector<1x512xf32>
    %12 = vector.broadcast %11 : vector<1x512xf32> to vector<16x512xf32>
    %13 = arith.mulf %10, %12 : vector<16x512xf32>
    %c0_7 = arith.constant 0 : index
    %c0_8 = arith.constant 0 : index
    %14 = vector.load %arg5[%c0_7, %c0_8] : memref<16x512xf32, #tpu.memory_space<vmem>>, vector<16x512xf32>
    tpu.vector_store %arg5[%c0_7, %c0_8], %13 {strides = array<i32>} : memref<16x512xf32, #tpu.memory_space<vmem>>, vector<16x512xf32>,
    return
  }
  func.func @transform_0(%arg0: i32, %arg1: i32) -> (i32, i32) {
    %c0_i32 = arith.constant 0 : i32
    %c0_i32_0 = arith.constant 0 : i32
    return %arg0, %c0_i32 : i32, i32
  }
  func.func @transform_1(%arg0: i32, %arg1: i32) -> (i32, i32) {
    %c0_i32 = arith.constant 0 : i32
    %c0_i32_0 = arith.constant 0 : i32
    return %c0_i32, %arg1 : i32, i32
  }
  func.func @transform_2(%arg0: i32, %arg1: i32) -> (i32, i32) {
    %c0_i32 = arith.constant 0 : i32
    %c0_i32_0 = arith.constant 0 : i32
    return %c0_i32, %arg1 : i32, i32
  }
  func.func @transform_3(%arg0: i32, %arg1: i32) -> (i32, i32) {
    %c0_i32 = arith.constant 0 : i32
    return %arg0, %arg1 : i32, i32
  }
}

</mosaic_0001>

<llo_original>
// kernel: tpu_custom_call.1
$region0: #{tpu_custom_call.1}
  #allocation0 [shape = 'u32[]', space=smem, size = 0x4, offset = 0x4, fixed_abs, tag = 'smem constant byte address 0x4 - core index']
  #allocation1 [shape = 'u32[144,128]{1,0:T(1,128)}', space=vmem, size = 0x12000, scoped, tag = 'internal scratch']
  %s0 = inlined_call_operand.hbm [shape: f32[16,64], index: 0, kind: input, shape index: {}]
  %s1 = inlined_call_operand.hbm [shape: f32[64,1024], index: 1, kind: input, shape index: {}]
  %s2 = inlined_call_operand.hbm [shape: f32[1,1024], index: 2, kind: input, shape index: {}]
  %s3 = inlined_call_operand.hbm [shape: f32[16,1024], index: 3, kind: output, shape index: {}]
  %s4 = sld [smem:[#allocation0]]
  $region57: #{tpu_custom_call.1} parent=0
    _
  %s6 = ssub.s32 1, %s4
  %s7 = scalar_select 0, %s6, %s4
  $region1: #{tpu_custom_call.1} parent=0
    #allocation2 [shape = 'u8[8192]{0}', space=vmem, size = 0x2000, scoped, tag = 'input window, operand 0, single buffered']
    #allocation3 [shape = 's32[2]{0}', space=sflag, size = 0x8, scoped, tag = 'scoped memory for tpu_custom_call.1']
    #allocation4 [shape = 's32[2]{0}', space=sflag, size = 0x8, scoped, tag = 'scoped memory for tpu_custom_call.1']
    #allocation5 [shape = 'u8[262144]{0}', space=vmem, size = 0x40000, scoped, tag = 'input window, operand 1']
    #allocation6 [shape = 's32[2]{0}', space=sflag, size = 0x8, scoped, tag = 'scoped memory for tpu_custom_call.1']
    #allocation7 [shape = 'u8[4096]{0}', space=vmem, size = 0x1000, scoped, tag = 'input window, operand 2']
    #allocation8 [shape = 'u8[65536]{0}', space=vmem, size = 0x10000, scoped, tag = 'output window, operand 0']
    %8 = vsyncpa [#allocation3], 0
    %9 = vsyncpa [#allocation6], 0
    %s10 = scalar_lea.sflag [#allocation6], 1
    %11 = vsyncpa %s10, 0
    %12 = vsyncpa [#allocation4], 0
    %s13 = scalar_lea.sflag [#allocation4], 1
    %14 = vsyncpa %s13, 0
    loop: start=0, step=1, limit=4
    $region2: #{tpu_custom_call.1} parent=1 // loop_pre_header
      _
    $region3: #{tpu_custom_call.1} parent=1 // loop_header
      %s16 = sphi 0, %s20
      %p17 = scmp.ge.s32.totalorder %s16, 4
      %s23 = sphi 0, %s35
      %s24 = sphi 0, %s31
      %s25 = sphi 0, %s23
      %s26 = sphi 0, %s24
      %s27 = sphi 0, %s25
      %s28 = sphi 0, %s26
      %s38 = sphi 0, %s40
      %s41 = sphi 0, %s38
      %s42 = sphi 0, %s41
      %s58 = sphi 0, %s42
      %s64 = sphi 0, %s66
      %s67 = sphi 0, %s64
      %s68 = sphi 0, %s67
      %s84 = sphi 0, %s68
      %s90 = sphi 0, %s92
      %s93 = sphi 0, %s90
      %s94 = sphi 0, %s93
      %s110 = sphi 0, %s94
      %s118 = sphi 0, %s120
      %s121 = sphi 0, %s118
      %s122 = sphi 0, %s121
      %s138 = sphi 0, %s122
    $region4: #{tpu_custom_call.1} parent=1 // loop_header_branch
      %19 = sbr.rel (%p17) target = $region8
    $region5: #{tpu_custom_call.1} parent=1 // loop_body
      %s21 = ssub.s32 %s16, 1
      %s22 = ssub.s32 %s16, 2
      %s29 = sadd.s32 1, %s24
      %p30 = scmp.ge.s32.totalorder %s29, 2
      %s31 = scalar_select %p30, 0, %s29
      %s32 = sadd.s32 1, %s23
      %s33 = scalar_select %p30, %s32, %s23
      %p34 = scmp.ge.s32.totalorder %s33, 1
      %s35 = scalar_select %p34, 0, %s33
      %s36 = ssub.s32 %s23, %s35
      %p37 = scmp.eq.s32.totalorder %s36, 0
      %s39 = sadd.s32 %s38, 1
      %s40 = scalar_select %p37, %s38, %s39
      %p43 = pneg %p37
      %p44 = scmp.eq.s32.totalorder %s16, 1
      %p45 = por %p43, %p44
      %p46 = scmp.ne.s32.totalorder %s38, %s41
      %p47 = scmp.eq.s32.totalorder %s16, 0
      %p48 = por %p46, %p47
      %p49 = scmp.ne.s32.totalorder %s38, %s41
      %p50 = scmp.eq.s32.totalorder %s21, 1
      %p51 = por %p49, %p50
      %p52 = scmp.ne.s32.totalorder %s41, %s42
      %p53 = scmp.eq.s32.totalorder %s21, 0
      %p54 = por %p52, %p53
      %p55 = scmp.ne.s32.totalorder %s41, %s42
      %p56 = scmp.eq.s32.totalorder %s22, 1
      %p57 = por %p55, %p56
      %p59 = scmp.ne.s32.totalorder %s42, %s58
      %p60 = scmp.eq.s32.totalorder %s22, 0
      %p61 = por %p59, %p60
      %s62 = ssub.s32 %s24, %s31
      %p63 = scmp.eq.s32.totalorder %s62, 0
      %s65 = sadd.s32 %s64, 1
      %s66 = scalar_select %p63, %s64, %s65
      %p69 = pneg %p63
      %p70 = scmp.eq.s32.totalorder %s16, 1
      %p71 = por %p69, %p70
      %p72 = scmp.ne.s32.totalorder %s64, %s67
      %p73 = scmp.eq.s32.totalorder %s16, 0
      %p74 = por %p72, %p73
      %p75 = scmp.ne.s32.totalorder %s64, %s67
      %p76 = scmp.eq.s32.totalorder %s21, 1
      %p77 = por %p75, %p76
      %p78 = scmp.ne.s32.totalorder %s67, %s68
      %p79 = scmp.eq.s32.totalorder %s21, 0
      %p80 = por %p78, %p79
      %p81 = scmp.ne.s32.totalorder %s67, %s68
      %p82 = scmp.eq.s32.totalorder %s22, 1
      %p83 = por %p81, %p82
      %p85 = scmp.ne.s32.totalorder %s68, %s84
      %p86 = scmp.eq.s32.totalorder %s22, 0
      %p87 = por %p85, %p86
      %s88 = ssub.s32 %s24, %s31
      %p89 = scmp.eq.s32.totalorder %s88, 0
      %s91 = sadd.s32 %s90, 1
      %s92 = scalar_select %p89, %s90, %s91
      %p95 = pneg %p89
      %p96 = scmp.eq.s32.totalorder %s16, 1
      %p97 = por %p95, %p96
      %p98 = scmp.ne.s32.totalorder %s90, %s93
      %p99 = scmp.eq.s32.totalorder %s16, 0
      %p100 = por %p98, %p99
      %p101 = scmp.ne.s32.totalorder %s90, %s93
      %p102 = scmp.eq.s32.totalorder %s21, 1
      %p103 = por %p101, %p102
      %p104 = scmp.ne.s32.totalorder %s93, %s94
      %p105 = scmp.eq.s32.totalorder %s21, 0
      %p106 = por %p104, %p105
      %p107 = scmp.ne.s32.totalorder %s93, %s94
      %p108 = scmp.eq.s32.totalorder %s22, 1
      %p109 = por %p107, %p108
      %p111 = scmp.ne.s32.totalorder %s94, %s110
      %p112 = scmp.eq.s32.totalorder %s22, 0
      %p113 = por %p111, %p112
      %s114 = ssub.s32 %s23, %s35
      %s115 = ssub.s32 %s24, %s31
      %s116 = sor.u32 %s114, %s115
      %p117 = scmp.eq.s32.totalorder %s116, 0
      %s119 = sadd.s32 %s118, 1
      %s120 = scalar_select %p117, %s118, %s119
      %p123 = pneg %p117
      %p124 = scmp.eq.s32.totalorder %s16, 1
      %p125 = por %p123, %p124
      %p126 = scmp.ne.s32.totalorder %s118, %s121
      %p127 = scmp.eq.s32.totalorder %s16, 0
      %p128 = por %p126, %p127
      %p129 = scmp.ne.s32.totalorder %s118, %s121
      %p130 = scmp.eq.s32.totalorder %s21, 1
      %p131 = por %p129, %p130
      %p132 = scmp.ne.s32.totalorder %s121, %s122
      %p133 = scmp.eq.s32.totalorder %s21, 0
      %p134 = por %p132, %p133
      %p135 = scmp.ne.s32.totalorder %s121, %s122
      %p136 = scmp.eq.s32.totalorder %s22, 1
      %p137 = por %p135, %p136
      %p139 = scmp.ne.s32.totalorder %s122, %s138
      %p140 = scmp.eq.s32.totalorder %s22, 0
      %p141 = por %p139, %p140
      %p142 = scmp.le.s32.totalorder 1, %s16
      %p143 = scmp.lt.s32.totalorder %s16, 3
      %p144 = pnand %p142, %p143
      %p145 = pneg %p144
      // Predicated region
      $region9: #{tpu_custom_call.1} parent=5 // pred_check
        _
      $region10: #{tpu_custom_call.1} parent=5 // pred_check_branch
        %147 = sbr.rel (%p144) target = $region12
      $region11: #{tpu_custom_call.1} parent=5 // pred_region
        %s148 = ssub.s32 %s16, 1
        // Predicated region
        $region13: #{tpu_custom_call.1} parent=11 // pred_check
          %p149 = pneg %p54
        $region14: #{tpu_custom_call.1} parent=11 // pred_check_branch
          %151 = sbr.rel (%p149) target = $region16
        $region15: #{tpu_custom_call.1} parent=11 // pred_region
          %s152 = smul.u32 2, %s25
          %s154 = ssub.s32 256, 256
          %155 = vsyncadd [#allocation3], %s154
          %s156 = smul.addr %s152, 128
          %s157 = scalar_lea.hbm %s0, %s156
          %s158 = sshll.u32 [#allocation2], 4
          %s159 = int_to_ptr.vmem [resolvable:$true] %s158
          %164 = dma.hbm_to_vmem [thread:$0]  %s157, 256, %s159, [#allocation3], 128, 128, 8
        $region16: #{tpu_custom_call.1} parent=11 // pred_fallthru
          _
      $region12: #{tpu_custom_call.1} parent=5 // pred_fallthru
        _
      %p165 = scmp.lt.s32.totalorder %s16, 2
      // Predicated region
      $region17: #{tpu_custom_call.1} parent=5 // pred_check
        %p166 = pneg %p165
      $region18: #{tpu_custom_call.1} parent=5 // pred_check_branch
        %168 = sbr.rel (%p166) target = $region20
      $region19: #{tpu_custom_call.1} parent=5 // pred_region
        // Predicated region
        $region21: #{tpu_custom_call.1} parent=19 // pred_check
          %p169 = pneg %p74
        $region22: #{tpu_custom_call.1} parent=19 // pred_check_branch
          %171 = sbr.rel (%p169) target = $region24
        $region23: #{tpu_custom_call.1} parent=19 // pred_region
          %s172 = sand.u32 %s16, 1
          %s173 = scalar_lea.sflag [#allocation6], %s172
          %s174 = sand.u32 %s64, 1
          %s175 = smul.addr %s174, 256
          %s176 = scalar_lea.vmem [#allocation5], %s175
          %s177 = smul.u32 4, %s24
          %s179 = ssub.s32 4096, 4096
          %180 = vsyncadd %s173, %s179
          %s181 = smul.addr %s177, 128
          %s182 = scalar_lea.hbm %s1, %s181
          %s183 = sshll.u32 %s176, 4
          %s184 = int_to_ptr.vmem [resolvable:$true] %s183
          %189 = dma.hbm_to_vmem [thread:$0]  %s182, 4096, %s184, %s173, 1024, 512, 32
        $region24: #{tpu_custom_call.1} parent=19 // pred_fallthru
          _
        // Predicated region
        $region25: #{tpu_custom_call.1} parent=19 // pred_check
          %p190 = pneg %p100
        $region26: #{tpu_custom_call.1} parent=19 // pred_check_branch
          %192 = sbr.rel (%p190) target = $region28
        $region27: #{tpu_custom_call.1} parent=19 // pred_region
          %s193 = sand.u32 %s16, 1
          %s194 = scalar_lea.sflag [#allocation6], %s193
          %s195 = sand.u32 %s90, 1
          %s196 = smul.addr %s195, 4
          %s197 = scalar_lea.vmem [#allocation7], %s196
          %s198 = smul.u32 4, %s24
          %s200 = ssub.s32 64, 64
          %201 = vsyncadd %s194, %s200
          %s202 = smul.addr %s198, 16
          %s203 = scalar_lea.hbm %s2, %s202
          %s205 = sshll.u32 %s197, 4
          %s206 = int_to_ptr.vmem [resolvable:$true] %s205
          %208 = dma.hbm_to_vmem [thread:$0]  %s203, 64, %s206, %s194
        $region28: #{tpu_custom_call.1} parent=19 // pred_fallthru
          _
      $region20: #{tpu_custom_call.1} parent=5 // pred_fallthru
        _
      %p209 = scmp.le.s32.totalorder 1, %s16
      %p210 = scmp.lt.s32.totalorder %s16, 3
      %p211 = pnand %p209, %p210
      %p212 = pneg %p211
      // Predicated region
      $region29: #{tpu_custom_call.1} parent=5 // pred_check
        _
      $region30: #{tpu_custom_call.1} parent=5 // pred_check_branch
        %214 = sbr.rel (%p211) target = $region32
      $region31: #{tpu_custom_call.1} parent=5 // pred_region
        %s215 = ssub.s32 %s16, 1
        // Predicated region
        $region33: #{tpu_custom_call.1} parent=31 // pred_check
          %p216 = pneg %p54
        $region34: #{tpu_custom_call.1} parent=31 // pred_check_branch
          %218 = sbr.rel (%p216) target = $region36
        $region35: #{tpu_custom_call.1} parent=31 // pred_region
          %219 = dma.done [#allocation3], 256
        $region36: #{tpu_custom_call.1} parent=31 // pred_fallthru
          _
        %s220 = sand.u32 %s21, 1
        %s221 = scalar_lea.sflag [#allocation6], %s220
        %s222 = sand.u32 %s67, 1
        %s223 = smul.addr %s222, 256
        %s224 = scalar_lea.vmem [#allocation5], %s223
        // Predicated region
        $region37: #{tpu_custom_call.1} parent=31 // pred_check
          %p225 = pneg %p80
        $region38: #{tpu_custom_call.1} parent=31 // pred_check_branch
          %227 = sbr.rel (%p225) target = $region40
        $region39: #{tpu_custom_call.1} parent=31 // pred_region
          %228 = dma.done %s221, 4096
        $region40: #{tpu_custom_call.1} parent=31 // pred_fallthru
          _
        %s229 = sand.u32 %s21, 1
        %s230 = scalar_lea.sflag [#allocation6], %s229
        %s231 = sand.u32 %s93, 1
        %s232 = smul.addr %s231, 4
        %s233 = scalar_lea.vmem [#allocation7], %s232
        // Predicated region
        $region41: #{tpu_custom_call.1} parent=31 // pred_check
          %p234 = pneg %p106
        $region42: #{tpu_custom_call.1} parent=31 // pred_check_branch
          %236 = sbr.rel (%p234) target = $region44
        $region43: #{tpu_custom_call.1} parent=31 // pred_region
          %237 = dma.done %s230, 64
        $region44: #{tpu_custom_call.1} parent=31 // pred_fallthru
          _
        %p238 = pneg %p54
        %p239 = pneg %p51
        %s240 = sand.u32 %s21, 1
        %s241 = scalar_lea.sflag [#allocation6], %s240
        %s242 = sand.u32 %s67, 1
        %s243 = smul.addr %s242, 256
        %s244 = scalar_lea.vmem [#allocation5], %s243
        %p245 = pneg %p80
        %p246 = pneg %p77
        %s247 = sand.u32 %s21, 1
        %s248 = scalar_lea.sflag [#allocation6], %s247
        %s249 = sand.u32 %s93, 1
        %s250 = smul.addr %s249, 4
        %s251 = scalar_lea.vmem [#allocation7], %s250
        %p252 = pneg %p106
        %p253 = pneg %p103
        %p254 = pneg %p134
        %p255 = pneg %p131
        %s256 = sand.u32 %s121, 1
        %s257 = scalar_lea.sflag [#allocation4], %s256
        %s258 = sand.u32 %s121, 1
        %s259 = smul.addr %s258, 64
        %s260 = scalar_lea.vmem [#allocation8], %s259
        %s261 = smul.u32 2, %s25
        %s262 = smul.u32 4, %s26
        %s263 = smul.u32 4, %s26
        %s264 = smul.u32 2, %s25
        %s265 = smul.u32 4, %s26
        %v266 = vld [vmem:[#allocation2] sm:$0xff]
        %v267 = vld [vmem:[#allocation2 + $0x8] sm:$0xff]
        %v268 = vmul.f32 %v266, %v266
        %v269 = vmul.f32 %v267, %v267
        %vm270 = vcmask 523264
        %v271 = vsel %vm270, %v268, 0.0
        %272 = vadd.xlane.f32.xlu0 %v271
        %v273 = vpop.xlane.xlu0 %272
        %v274 = vsel %vm270, %v269, 0.0
        %275 = vadd.xlane.f32.xlu0 %v274
        %v276 = vpop.xlane.xlu0 %275
        %v277 = vmax.f32 %v273, 1e-24
        %v278 = vmax.f32 %v276, 1e-24
        %v279 = vrsqrt.pop %v277
        %v280 = vrsqrt.pop %v278
        %v281 = vld [vmem:[%s224] sm:$0xff]
        %v282 = vld [vmem:[%s224 + $0x8] sm:$0xff]
        %v283 = vld [vmem:[%s224 + $0x10] sm:$0xff]
        %v284 = vld [vmem:[%s224 + $0x18] sm:$0xff]
        %v285 = vld [vmem:[%s224 + $0x20] sm:$0xff]
        %v286 = vld [vmem:[%s224 + $0x28] sm:$0xff]
        %v287 = vld [vmem:[%s224 + $0x30] sm:$0xff]
        %v288 = vld [vmem:[%s224 + $0x38] sm:$0xff]
        %v289 = vld [vmem:[%s224 + $0x40] sm:$0xff]
        %v290 = vld [vmem:[%s224 + $0x48] sm:$0xff]
        %v291 = vld [vmem:[%s224 + $0x50] sm:$0xff]
        %v292 = vld [vmem:[%s224 + $0x58] sm:$0xff]
        %v293 = vld [vmem:[%s224 + $0x60] sm:$0xff]
        %v294 = vld [vmem:[%s224 + $0x68] sm:$0xff]
        %v295 = vld [vmem:[%s224 + $0x70] sm:$0xff]
        %v296 = vld [vmem:[%s224 + $0x78] sm:$0xff]
        %v297 = vld [vmem:[%s224 + $0x80] sm:$0xff]
        %v298 = vld [vmem:[%s224 + $0x88] sm:$0xff]
        %v299 = vld [vmem:[%s224 + $0x90] sm:$0xff]
        %v300 = vld [vmem:[%s224 + $0x98] sm:$0xff]
        %v301 = vld [vmem:[%s224 + $0xa0] sm:$0xff]
        %v302 = vld [vmem:[%s224 + $0xa8] sm:$0xff]
        %v303 = vld [vmem:[%s224 + $0xb0] sm:$0xff]
        %v304 = vld [vmem:[%s224 + $0xb8] sm:$0xff]
        %v305 = vld [vmem:[%s224 + $0xc0] sm:$0xff]
        %v306 = vld [vmem:[%s224 + $0xc8] sm:$0xff]
        %v307 = vld [vmem:[%s224 + $0xd0] sm:$0xff]
        %v308 = vld [vmem:[%s224 + $0xd8] sm:$0xff]
        %v309 = vld [vmem:[%s224 + $0xe0] sm:$0xff]
        %v310 = vld [vmem:[%s224 + $0xe8] sm:$0xff]
        %v311 = vld [vmem:[%s224 + $0xf0] sm:$0xff]
        %v312 = vld [vmem:[%s224 + $0xf8] sm:$0xff]
        %v314 = vsel %vm270, %v266, 0
        %v317 = vsel %vm270, %v267, 0
        %319 = vmatprep.subr.mxu0 %v282
        %320 = vmatpush1.msra.mxu0 %v281
        %321 = vmatprep.subr.mxu0 %v286
        %322 = vmatpush1.msra.mxu0 %v285
        %323 = vmatprep.subr.mxu0 %v290
        %324 = vmatpush1.msra.mxu0 %v289
        %325 = vmatprep.subr.mxu0 %v294
        %326 = vmatpush1.msra.mxu0 %v293
        %327 = vmatprep.subr.mxu0 %v298
        %328 = vmatpush1.msra.mxu0 %v297
        %329 = vmatprep.subr.mxu0 %v302
        %330 = vmatpush1.msra.mxu0 %v301
        %331 = vmatprep.subr.mxu0 %v306
        %332 = vmatpush1.msra.mxu0 %v305
        %333 = vmatprep.subr.mxu0 %v310
        %334 = vmatpush1.msra.mxu0 %v309
        %335 = vmatprep.subr.mxu0 0.0
        %336 = vmatpush1.msra.mxu0 0.0
        %337 = vmatprep.subr.mxu0 0.0
        %338 = vmatpush1.msra.mxu0 0.0
        %339 = vmatprep.subr.mxu0 0.0
        %340 = vmatpush1.msra.mxu0 0.0
        %341 = vmatprep.subr.mxu0 0.0
        %342 = vmatpush1.msra.mxu0 0.0
        %343 = vmatprep.subr.mxu0 0.0
        %344 = vmatpush1.msra.mxu0 0.0
        %345 = vmatprep.subr.mxu0 0.0
        %346 = vmatpush1.msra.mxu0 0.0
        %347 = vmatprep.subr.mxu0 0.0
        %348 = vmatpush1.msra.mxu0 0.0
        %349 = vmatprep.subr.mxu0 0.0
        %350 = vmatpush1.msra.mxu0 0.0
        %351 = vmatprep.subr.mxu0 0.0
        %352 = vmatpush1.msra.mxu0 0.0
        %353 = vmatprep.subr.mxu0 0.0
        %354 = vmatpush1.msra.mxu0 0.0
        %355 = vmatprep.subr.mxu0 0.0
        %356 = vmatpush1.msra.mxu0 0.0
        %357 = vmatprep.subr.mxu0 0.0
        %358 = vmatpush1.msra.mxu0 0.0
        %359 = vmatprep.subr.mxu0 0.0
        %360 = vmatpush1.msra.mxu0 0.0
        %361 = vmatprep.subr.mxu0 0.0
        %362 = vmatpush1.msra.mxu0 0.0
        %363 = vmatprep.subr.mxu0 0.0
        %364 = vmatpush1.msra.mxu0 0.0
        %365 = vmatprep.subr.mxu0 0.0
        %366 = vmatpush1.msra.mxu0 0.0
        %367 = vmatprep.subr.mxu0 0.0
        %368 = vmatpush1.msra.mxu0 0.0
        %369 = vmatprep.subr.mxu0 0.0
        %370 = vmatpush1.msra.mxu0 0.0
        %371 = vmatprep.subr.mxu0 0.0
        %372 = vmatpush1.msra.mxu0 0.0
        %373 = vmatprep.subr.mxu0 0.0
        %374 = vmatpush1.msra.mxu0 0.0
        %375 = vmatprep.subr.mxu0 0.0
        %376 = vmatpush1.msra.mxu0 0.0
        %377 = vmatprep.subr.mxu0 0.0
        %378 = vmatpush1.msra.mxu0 0.0
        %379 = vmatprep.subr.mxu0 0.0
        %380 = vmatpush1.msra.mxu0 0.0
        %381 = vmatprep.subr.mxu0 0.0
        %382 = vmatpush1.msra.mxu0 0.0
        %383 = vmatprep.mubr.f32.mxu0 0.0
        %384 = vmatmul.mubr.f32.gmra.mrb[0].mxu0 %v314
        %v385 = vpop.f32.mrb[0].mxu0
        %v386 = vadd.f32 0.0, %v385
        %v387 = vpop.f32.mrb[0].mxu0
        %v388 = vadd.f32 0.0, %v387
        %389 = vmatprep.mubr.f32.mxu0 0.0
        %390 = vmatmul.mubr.f32.gmra.mrb[0].mxu0 %v317
        %v391 = vpop.f32.mrb[0].mxu0
        %v392 = vadd.f32 0.0, %v391
        %v393 = vpop.f32.mrb[0].mxu0
        %v394 = vadd.f32 0.0, %v393
        %395 = vdwg.mxu0
        %396 = vmatprep.subr.mxu0 %v284
        %397 = vmatpush1.msra.mxu0 %v283
        %398 = vmatprep.subr.mxu0 %v288
        %399 = vmatpush1.msra.mxu0 %v287
        %400 = vmatprep.subr.mxu0 %v292
        %401 = vmatpush1.msra.mxu0 %v291
        %402 = vmatprep.subr.mxu0 %v296
        %403 = vmatpush1.msra.mxu0 %v295
        %404 = vmatprep.subr.mxu0 %v300
        %405 = vmatpush1.msra.mxu0 %v299
        %406 = vmatprep.subr.mxu0 %v304
        %407 = vmatpush1.msra.mxu0 %v303
        %408 = vmatprep.subr.mxu0 %v308
        %409 = vmatpush1.msra.mxu0 %v307
        %410 = vmatprep.subr.mxu0 %v312
        %411 = vmatpush1.msra.mxu0 %v311
        %412 = vmatprep.subr.mxu0 0.0
        %413 = vmatpush1.msra.mxu0 0.0
        %414 = vmatprep.subr.mxu0 0.0
        %415 = vmatpush1.msra.mxu0 0.0
        %416 = vmatprep.subr.mxu0 0.0
        %417 = vmatpush1.msra.mxu0 0.0
        %418 = vmatprep.subr.mxu0 0.0
        %419 = vmatpush1.msra.mxu0 0.0
        %420 = vmatprep.subr.mxu0 0.0
        %421 = vmatpush1.msra.mxu0 0.0
        %422 = vmatprep.subr.mxu0 0.0
        %423 = vmatpush1.msra.mxu0 0.0
        %424 = vmatprep.subr.mxu0 0.0
        %425 = vmatpush1.msra.mxu0 0.0
        %426 = vmatprep.subr.mxu0 0.0
        %427 = vmatpush1.msra.mxu0 0.0
        %428 = vmatprep.subr.mxu0 0.0
        %429 = vmatpush1.msra.mxu0 0.0
        %430 = vmatprep.subr.mxu0 0.0
        %431 = vmatpush1.msra.mxu0 0.0
        %432 = vmatprep.subr.mxu0 0.0
        %433 = vmatpush1.msra.mxu0 0.0
        %434 = vmatprep.subr.mxu0 0.0
        %435 = vmatpush1.msra.mxu0 0.0
        %436 = vmatprep.subr.mxu0 0.0
        %437 = vmatpush1.msra.mxu0 0.0
        %438 = vmatprep.subr.mxu0 0.0
        %439 = vmatpush1.msra.mxu0 0.0
        %440 = vmatprep.subr.mxu0 0.0
        %441 = vmatpush1.msra.mxu0 0.0
        %442 = vmatprep.subr.mxu0 0.0
        %443 = vmatpush1.msra.mxu0 0.0
        %444 = vmatprep.subr.mxu0 0.0
        %445 = vmatpush1.msra.mxu0 0.0
        %446 = vmatprep.subr.mxu0 0.0
        %447 = vmatpush1.msra.mxu0 0.0
        %448 = vmatprep.subr.mxu0 0.0
        %449 = vmatpush1.msra.mxu0 0.0
        %450 = vmatprep.subr.mxu0 0.0
        %451 = vmatpush1.msra.mxu0 0.0
        %452 = vmatprep.subr.mxu0 0.0
        %453 = vmatpush1.msra.mxu0 0.0
        %454 = vmatprep.subr.mxu0 0.0
        %455 = vmatpush1.msra.mxu0 0.0
        %456 = vmatprep.subr.mxu0 0.0
        %457 = vmatpush1.msra.mxu0 0.0
        %458 = vmatprep.subr.mxu0 0.0
        %459 = vmatpush1.msra.mxu0 0.0
        %460 = vmatprep.mubr.f32.mxu0 0.0
        %461 = vmatmul.mubr.f32.gmra.mrb[0].mxu0 %v314
        %v462 = vpop.f32.mrb[0].mxu0
        %v463 = vadd.f32 0.0, %v462
        %v464 = vpop.f32.mrb[0].mxu0
        %v465 = vadd.f32 0.0, %v464
        %466 = vmatprep.mubr.f32.mxu0 0.0
        %467 = vmatmul.mubr.f32.gmra.mrb[0].mxu0 %v317
        %v468 = vpop.f32.mrb[0].mxu0
        %v469 = vadd.f32 0.0, %v468
        %v470 = vpop.f32.mrb[0].mxu0
        %v471 = vadd.f32 0.0, %v470
        %472 = vdwg.mxu0
        %v473 = vmul.f32 %v386, %v279
        %v474 = vmul.f32 %v388, %v279
        %v475 = vmul.f32 %v463, %v279
        %v476 = vmul.f32 %v465, %v279
        %v477 = vmul.f32 %v392, %v280
        %v478 = vmul.f32 %v394, %v280
        %v479 = vmul.f32 %v469, %v280
        %v480 = vmul.f32 %v471, %v280
        %v481 = vld [vmem:[%s233] sm:$0xf]
        %v483 = vlaneseq
        %v484 = vshrl.u32 %v483, 7
        %v485 = vsub.s32 0, %v484
        %v486 = vrot.slane %v481, %v485
        %v487 = vlaneseq
        %v488 = vshrl.u32 %v487, 7
        %v489 = vsub.s32 1, %v488
        %v490 = vrot.slane %v481, %v489
        %v491 = vlaneseq
        %v492 = vshrl.u32 %v491, 7
        %v493 = vsub.s32 2, %v492
        %v494 = vrot.slane %v481, %v493
        %v495 = vlaneseq
        %v496 = vshrl.u32 %v495, 7
        %v497 = vsub.s32 3, %v496
        %v498 = vrot.slane %v481, %v497
        %v503 = vmul.f32 %v473, %v486
        %v504 = vmul.f32 %v474, %v490
        %v505 = vmul.f32 %v475, %v494
        %v506 = vmul.f32 %v476, %v498
        %v507 = vmul.f32 %v477, %v486
        %v508 = vmul.f32 %v478, %v490
        %v509 = vmul.f32 %v479, %v494
        %v510 = vmul.f32 %v480, %v498
        %511 = vst [vmem:[%s260] sm:$0xff] %v503
        %512 = vst [vmem:[%s260 + $0x8] sm:$0xff] %v504
        %513 = vst [vmem:[%s260 + $0x10] sm:$0xff] %v505
        %514 = vst [vmem:[%s260 + $0x18] sm:$0xff] %v506
        %515 = vst [vmem:[%s260 + $0x20] sm:$0xff] %v507
        %516 = vst [vmem:[%s260 + $0x28] sm:$0xff] %v508
        %517 = vst [vmem:[%s260 + $0x30] sm:$0xff] %v509
        %518 = vst [vmem:[%s260 + $0x38] sm:$0xff] %v510
        %s519 = sand.u32 %s121, 1
        %s520 = scalar_lea.sflag [#allocation4], %s519
        %s521 = sand.u32 %s121, 1
        %s522 = smul.addr %s521, 64
        %s523 = scalar_lea.vmem [#allocation8], %s522
        // Predicated region
        $region45: #{tpu_custom_call.1} parent=31 // pred_check
          %p524 = pneg %p131
        $region46: #{tpu_custom_call.1} parent=31 // pred_check_branch
          %526 = sbr.rel (%p524) target = $region48
        $region47: #{tpu_custom_call.1} parent=31 // pred_region
          %s527 = smul.u32 2, %s25
          %s528 = smul.u32 4, %s26
          %s530 = ssub.s32 1024, 1024
          %531 = vsyncadd %s520, %s530
          %s532 = smul.addr %s527, 8
          %s533 = sadd.s32 %s528, %s532
          %s534 = smul.addr %s533, 128
          %s535 = scalar_lea.hbm %s3, %s534
          %s536 = sshll.u32 %s523, 4
          %s537 = int_to_ptr.vmem [resolvable:$true] %s536
          %542 = dma.vmem_to_hbm [thread:$0]  %s537, 1024, %s535, %s520, 512, 1024, 32
        $region48: #{tpu_custom_call.1} parent=31 // pred_fallthru
          _
      $region32: #{tpu_custom_call.1} parent=5 // pred_fallthru
        _
      %p543 = scmp.le.s32.totalorder 2, %s16
      // Predicated region
      $region49: #{tpu_custom_call.1} parent=5 // pred_check
        %p544 = pneg %p543
      $region50: #{tpu_custom_call.1} parent=5 // pred_check_branch
        %546 = sbr.rel (%p544) target = $region52
      $region51: #{tpu_custom_call.1} parent=5 // pred_region
        %s547 = ssub.s32 %s16, 2
        // Predicated region
        $region53: #{tpu_custom_call.1} parent=51 // pred_check
          %p548 = pneg %p137
        $region54: #{tpu_custom_call.1} parent=51 // pred_check_branch
          %550 = sbr.rel (%p548) target = $region56
        $region55: #{tpu_custom_call.1} parent=51 // pred_region
          %s551 = sand.u32 %s122, 1
          %s552 = scalar_lea.sflag [#allocation4], %s551
          %s553 = sand.u32 %s122, 1
          %s554 = smul.addr %s553, 64
          %s555 = scalar_lea.vmem [#allocation8], %s554
          %556 = dma.done %s552, 1024
        $region56: #{tpu_custom_call.1} parent=51 // pred_fallthru
          _
      $region52: #{tpu_custom_call.1} parent=5 // pred_fallthru
        _
    $region6: #{tpu_custom_call.1} parent=1 // loop_footer
      %s20 = sadd.s32 1, %s16
    $region7: #{tpu_custom_call.1} parent=1 // loop_footer_branch
      %15 = sbr.rel target = $region3
    $region8: #{tpu_custom_call.1} parent=1 // loop_exit
      _
    %557 = vsyncpa [#allocation3], 1
    %s558 = scalar_lea.sflag [#allocation3], 1
    %559 = vsyncpa %s558, 1
    %560 = vsyncpa [#allocation6], 1
    %s561 = scalar_lea.sflag [#allocation6], 1
    %562 = vsyncpa %s561, 1
    %563 = vsyncpa [#allocation4], 1
    %s564 = scalar_lea.sflag [#allocation4], 1
    %565 = vsyncpa %s564, 1

</llo_original>
